<compile_context>
chip_gen: v7x
topology: tpu7x:2x2x1
jax: 0.10.0
libtpu: 0.0.40
codegen_flags: <defaults>
</compile_context>

<pallas_src>
import jax
import jax.numpy as jnp
from jax.experimental import pallas as pl
from jax.experimental.pallas import tpu as pltpu


def _round_up(a, m):
    return (a + m - 1) // m * m


def _pick_tile(total, cap, unit):
    """Largest multiple of `unit` that divides `total` and is <= cap."""
    best = unit
    t = unit
    while t <= min(total, cap):
        if total % t == 0:
            best = t
        t += unit
    return best


def _tb_cap():
    # 256x256 MXU on v6e/v7x -> TB up to 256; v5e's 128x128 MXUs stay at 128.
    try:
        kind = jax.devices()[0].device_kind.lower()
    except Exception:
        return 128
    if "v5 lite" in kind or "v5e" in kind or "v5lite" in kind:
        return 128
    return 256


# ----------------------------------------------------------------------------
# Pallas kernel: segment-sum O = S @ X, accumulated directly in the f32 output
# ----------------------------------------------------------------------------
def _segment_pool_kernel(s_ref, x_ref, o_ref):
    # s_ref: (TB, TN)  assignment tile (0/1 for sum, 1/count for mean)
    # x_ref: (TN, TF)  node-feature tile (native dtype)
    # o_ref: (TB, TF)  f32 output tile, resident across the node axis
    nj = pl.program_id(2)

    @pl.when(nj == 0)
    def _():
        o_ref[...] = jnp.zeros_like(o_ref)

    o_ref[...] += jnp.dot(
        s_ref[...], x_ref[...], preferred_element_type=jnp.float32
    )


def _segment_pool(x, batch, num_graphs, *, mean):
    N, F = x.shape
    itemsize = jnp.dtype(x.dtype).itemsize

    # ---- tiling --------------------------------------------------------
    # feature dim lane-padded to a multiple of 128 -> unmasked stores
    Fp = _round_up(max(F, 1), 128)
    TF = _pick_tile(Fp, 512, 128)

    # graph (output-row) tile: multiple of 8 sublanes, cap per MXU size
    cap = _tb_cap()
    TB = cap if num_graphs > cap else _round_up(max(num_graphs, 1), 8)
    Bp = _round_up(max(num_graphs, 1), TB)

    # node (reduction) tile: VMEM-budget-driven, multiple of 128, cap 2048
    in_budget = (40 << 20) - 2 * TB * TF * 4  # leave room for resident out tile
    per_tn_row = 2 * (TB + TF) * itemsize     # double-buffered S row + X row
    tn_fit = max(128, (in_budget // per_tn_row) // 128 * 128)
    TN = int(min(2048, tn_fit, _round_up(max(N, 1), 128)))
    Np = _round_up(max(N, 1), TN)

    # ---- build S (plain-JAX glue, fused compare/scale/cast) -------------
    # S[b, n] = 1[batch[n] == b]           (sum_pool)
    #         = 1[batch[n] == b] / count_b (mean_pool; exact f32 division,
    #                                       so no in-kernel reciprocal needed)
    onehot = jnp.arange(Bp, dtype=batch.dtype)[:, None] == batch[None, :]
    if mean:
        counts = jnp.zeros((Bp,), jnp.float32).at[batch].add(1.0)
        scale = (1.0 / jnp.maximum(counts, 1.0)).astype(x.dtype)
        s = onehot.astype(x.dtype) * scale[:, None]
    else:
        s = onehot.astype(x.dtype)
    if Np != N:
        s = jnp.pad(s, ((0, 0), (0, Np - N)))

    # ---- pad X only if required (no dtype cast, no extra pass otherwise) -
    if Np != N or Fp != F:
        # zero-pad: padded node rows meet zero S columns -> no NaN hazard
        xp = jnp.pad(x, ((0, Np - N), (0, Fp - F)))
    else:
        xp = x

    out = pl.pallas_call(
        _segment_pool_kernel,
        out_shape=jax.ShapeDtypeStruct((Bp, Fp), jnp.float32),
        grid_spec=pltpu.PrefetchScalarGridSpec(
            num_scalar_prefetch=0,
            # (graph tiles, feature tiles, node tiles) -- reduction axis last;
            # the feature axis gives v7x's two TensorCores parallel work even
            # when there is a single graph tile.
            grid=(Bp // TB, Fp // TF, Np // TN),
            in_specs=[
                pl.BlockSpec((TB, TN), lambda bi, fi, ni: (bi, ni)),
                pl.BlockSpec((TN, TF), lambda bi, fi, ni: (ni, fi)),
            ],
            out_specs=pl.BlockSpec((TB, TF), lambda bi, fi, ni: (bi, fi)),
        ),
        compiler_params=pltpu.CompilerParams(
            dimension_semantics=("parallel", "parallel", "arbitrary"),
            vmem_limit_bytes=48 << 20,
        ),
    )(s, xp)
    return out[:num_graphs, :F].astype(x.dtype)


# ----------------------------------------------------------------------------
# Pool.forward equivalent
# ----------------------------------------------------------------------------
def pool_forward(x, edge_index, batch, num_graphs, type="mean_pool"):
    # edge_index is only consumed by the 'sag_pool' branch in the reference
    # module; the default ('mean_pool') branch ignores it.
    if type == "mean_pool":
        return _segment_pool(x, batch, num_graphs, mean=True)
    elif type == "sum_pool":
        return _segment_pool(x, batch, num_graphs, mean=False)
    elif type == "max_pool":
        # TODO(synk): segment max (global_max_pool) has no clean dense-MXU
        # formulation; not implemented as a Pallas kernel here.
        raise NotImplementedError("max_pool")
    elif type == "sag_pool":
        # TODO(synk): SAGPooling (GNN scoring + data-dependent top-k node
        # selection) has dynamic output shapes; not implemented in Pallas.
        raise NotImplementedError("sag_pool")
    else:
        raise ValueError(type)


if __name__ == "__main__":
    key = jax.random.PRNGKey(0)

    B = 2          # graphs in the batch
    NODES = 8      # nodes per graph  -> N = 16 total
    IN_CH = 32     # in_channels
    N = B * NODES

    x = jax.random.normal(key, (N, IN_CH), dtype=jnp.float32)
    batch = jnp.repeat(jnp.arange(B, dtype=jnp.int32), NODES)

    # per-graph ring edges (unused by the mean_pool branch; kept for API parity)
    src = jnp.arange(N, dtype=jnp.int32)
    dst = (src + 1) % NODES + (src // NODES) * NODES
    edge_index = jnp.stack(
        [jnp.concatenate([src, dst]), jnp.concatenate([dst, src])], axis=0
    )

    out = pool_forward(x, edge_index, batch, num_graphs=B, type="mean_pool")
    out = jax.block_until_ready(out)

    # pure-JAX reference: global_mean_pool == per-graph mean (equal-size graphs)
    ref_mean = x.reshape(B, NODES, IN_CH).mean(axis=1)
    assert out.shape == (B, IN_CH)
    assert bool(jnp.all(jnp.isfinite(out)))
    assert bool(jnp.allclose(out, ref_mean, rtol=1e-4, atol=1e-5))

    # also exercise the sum_pool branch (0/1 assignment, exact)
    out_sum = pool_forward(x, edge_index, batch, num_graphs=B, type="sum_pool")
    out_sum = jax.block_until_ready(out_sum)
    ref_sum = x.reshape(B, NODES, IN_CH).sum(axis=1)
    assert bool(jnp.allclose(out_sum, ref_sum, rtol=1e-5, atol=1e-5))

    print("KERNEL_OK")
</pallas_src>

<mosaic_0001>
module attributes {stable_mosaic.version = 11 : i64} {
  func.func @_segment_pool_kernel(%arg0: i32, %arg1: i32, %arg2: i32, %arg3: memref<8x128xf32, #tpu.memory_space<vmem>>, %arg4: memref<128x128xf32, #tpu.memory_space<vmem>>, %arg5: memref<8x128xf32, #tpu.memory_space<vmem>>) attributes {dimension_semantics = [#tpu.dimension_semantics<parallel>, #tpu.dimension_semantics<parallel>, #tpu.dimension_semantics<arbitrary>], iteration_bounds = array<i64: 1, 1, 1>, scalar_prefetch = 0 : i64, scratch_operands = 0 : i64, tpu.core_type = #tpu.core_type<tc>, window_params = [{transform_indices = @transform_0, window_bounds = array<i64: 8, 128>}, {transform_indices = @transform_1, window_bounds = array<i64: 128, 128>}, {transform_indices = @transform_2, window_bounds = array<i64: 8, 128>}]} {
    %c0_i32 = arith.constant 0 : i32
    %0 = arith.cmpi eq, %arg2, %c0_i32 : i32
    %1 = arith.extui %0 : i1 to i32
    %c0_i32_0 = arith.constant 0 : i32
    %2 = arith.cmpi ne, %1, %c0_i32_0 : i32
    scf.if %2 {
      %cst_8 = arith.constant 0.000000e+00 : f32
      %9 = vector.broadcast %cst_8 : f32 to vector<8x128xf32>
      %c0_9 = arith.constant 0 : index
      %c0_10 = arith.constant 0 : index
      %10 = vector.load %arg5[%c0_9, %c0_10] : memref<8x128xf32, #tpu.memory_space<vmem>>, vector<8x128xf32>
      tpu.vector_store %arg5[%c0_9, %c0_10], %9 {strides = array<i32>} : memref<8x128xf32, #tpu.memory_space<vmem>>, vector<8x128xf32>,
    } else {
    }
    %c0 = arith.constant 0 : index
    %c0_1 = arith.constant 0 : index
    %3 = vector.load %arg5[%c0, %c0_1] : memref<8x128xf32, #tpu.memory_space<vmem>>, vector<8x128xf32>
    %c0_2 = arith.constant 0 : index
    %c0_3 = arith.constant 0 : index
    %4 = vector.load %arg3[%c0_2, %c0_3] : memref<8x128xf32, #tpu.memory_space<vmem>>, vector<8x128xf32>
    %c0_4 = arith.constant 0 : index
    %c0_5 = arith.constant 0 : index
    %5 = vector.load %arg4[%c0_4, %c0_5] : memref<128x128xf32, #tpu.memory_space<vmem>>, vector<128x128xf32>
    %cst = arith.constant dense<0.000000e+00> : vector<8x128xf32>
    %6 = tpu.matmul %4, %5, %cst {dimension_numbers = #tpu.dot_dimension_numbers<[1], [0], [0], [1], [0, 0, 1, 1], [], []>} : vector<8x128xf32>, vector<128x128xf32>, vector<8x128xf32> -> vector<8x128xf32>
    %7 = arith.addf %3, %6 : vector<8x128xf32>
    %c0_6 = arith.constant 0 : index
    %c0_7 = arith.constant 0 : index
    %8 = vector.load %arg5[%c0_6, %c0_7] : memref<8x128xf32, #tpu.memory_space<vmem>>, vector<8x128xf32>
    tpu.vector_store %arg5[%c0_6, %c0_7], %7 {strides = array<i32>} : memref<8x128xf32, #tpu.memory_space<vmem>>, vector<8x128xf32>,
    return
  }
  func.func @transform_0(%arg0: i32, %arg1: i32, %arg2: i32) -> (i32, i32) {
    %c0_i32 = arith.constant 0 : i32
    return %arg0, %arg2 : i32, i32
  }
  func.func @transform_1(%arg0: i32, %arg1: i32, %arg2: i32) -> (i32, i32) {
    %c0_i32 = arith.constant 0 : i32
    return %arg2, %arg1 : i32, i32
  }
  func.func @transform_2(%arg0: i32, %arg1: i32, %arg2: i32) -> (i32, i32) {
    %c0_i32 = arith.constant 0 : i32
    return %arg0, %arg1 : i32, i32
  }
}

</mosaic_0001>

<llo_original>
// kernel: tpu_custom_call.1
$region0: #{tpu_custom_call.1}
  #allocation0 [shape = 'u32[]', space=smem, size = 0x4, offset = 0x4, fixed_abs, tag = 'smem constant byte address 0x4 - core index']
  #allocation1 [shape = 'u32[144,128]{1,0:T(1,128)}', space=vmem, size = 0x12000, scoped, tag = 'internal scratch']
  %s0 = inlined_call_operand.hbm [shape: f32[8,128], index: 0, kind: input, shape index: {}]
  %s1 = inlined_call_operand.hbm [shape: f32[128,128], index: 1, kind: input, shape index: {}]
  %s2 = inlined_call_operand.hbm [shape: f32[8,128], index: 2, kind: output, shape index: {}]
  %s3 = sld [smem:[#allocation0]]
  $region30: #{tpu_custom_call.1} parent=0
    _
  %s5 = ssub.s32 1, %s3
  %s6 = scalar_select 0, %s5, %s3
  $region1: #{tpu_custom_call.1} parent=0
    #allocation2 [shape = 'u8[4096]{0}', space=vmem, size = 0x1000, scoped, tag = 'input window, operand 0, single buffered']
    #allocation3 [shape = 's32[1]{0}', space=sflag, size = 0x4, scoped, tag = 'scoped memory for tpu_custom_call.1']
    #allocation4 [shape = 's32[1]{0}', space=sflag, size = 0x4, scoped, tag = 'scoped memory for tpu_custom_call.1']
    #allocation5 [shape = 'u8[65536]{0}', space=vmem, size = 0x10000, scoped, tag = 'input window, operand 1, single buffered']
    #allocation6 [shape = 's32[1]{0}', space=sflag, size = 0x4, scoped, tag = 'scoped memory for tpu_custom_call.1']
    #allocation7 [shape = 'u8[4096]{0}', space=vmem, size = 0x1000, scoped, tag = 'output window, operand 0, single buffered']
    %7 = vsyncpa [#allocation3], 0
    %8 = vsyncpa [#allocation6], 0
    %9 = vsyncpa [#allocation4], 0
    // Predicated region
    $region2: #{tpu_custom_call.1} parent=1 // pred_check
      _
    $region3: #{tpu_custom_call.1} parent=1 // pred_check_branch
      %11 = sbr.rel (0) target = $region5
    $region4: #{tpu_custom_call.1} parent=1 // pred_region
      %s13 = ssub.s32 128, 128
      %14 = vsyncadd [#allocation3], %s13
      %s16 = sshll.u32 [#allocation2], 4
      %s17 = int_to_ptr.vmem [resolvable:$true] %s16
      %19 = dma.hbm_to_vmem [thread:$0]  %s0, 128, %s17, [#allocation3]
    $region5: #{tpu_custom_call.1} parent=1 // pred_fallthru
      _
    // Predicated region
    $region6: #{tpu_custom_call.1} parent=1 // pred_check
      _
    $region7: #{tpu_custom_call.1} parent=1 // pred_check_branch
      %21 = sbr.rel (0) target = $region9
    $region8: #{tpu_custom_call.1} parent=1 // pred_region
      %s23 = ssub.s32 2048, 2048
      %24 = vsyncadd [#allocation6], %s23
      %s25 = sshll.u32 [#allocation5], 4
      %s26 = int_to_ptr.vmem [resolvable:$true] %s25
      %31 = dma.hbm_to_vmem [thread:$0]  %s1, 2048, %s26, [#allocation6], 128, 128, 8
    $region9: #{tpu_custom_call.1} parent=1 // pred_fallthru
      _
    // Predicated region
    $region10: #{tpu_custom_call.1} parent=1 // pred_check
      _
    $region11: #{tpu_custom_call.1} parent=1 // pred_check_branch
      %33 = sbr.rel (0) target = $region13
    $region12: #{tpu_custom_call.1} parent=1 // pred_region
      %34 = dma.done [#allocation3], 128
    $region13: #{tpu_custom_call.1} parent=1 // pred_fallthru
      _
    // Predicated region
    $region14: #{tpu_custom_call.1} parent=1 // pred_check
      _
    $region15: #{tpu_custom_call.1} parent=1 // pred_check_branch
      %36 = sbr.rel (0) target = $region17
    $region16: #{tpu_custom_call.1} parent=1 // pred_region
      %37 = dma.done [#allocation6], 2048
    $region17: #{tpu_custom_call.1} parent=1 // pred_fallthru
      _
    %p38 = scmp.eq.s32.totalorder 0, 0
    // Predicated region
    $region18: #{tpu_custom_call.1} parent=1 // pred_check
      %p39 = pneg %p38
    $region19: #{tpu_custom_call.1} parent=1 // pred_check_branch
      %41 = sbr.rel (%p39) target = $region21
    $region20: #{tpu_custom_call.1} parent=1 // pred_region
      %42 = vst [vmem:[#allocation7] sm:$0xff] 0.0
    $region21: #{tpu_custom_call.1} parent=1 // pred_fallthru
      _
    %v43 = vld [vmem:[#allocation7] sm:$0xff]
    %v44 = vld [vmem:[#allocation2] sm:$0xff]
    %v45 = vld [vmem:[#allocation5] sm:$0xff]
    %v46 = vld [vmem:[#allocation5 + $0x8] sm:$0xff]
    %v47 = vld [vmem:[#allocation5 + $0x10] sm:$0xff]
    %v48 = vld [vmem:[#allocation5 + $0x18] sm:$0xff]
    %v49 = vld [vmem:[#allocation5 + $0x20] sm:$0xff]
    %v50 = vld [vmem:[#allocation5 + $0x28] sm:$0xff]
    %v51 = vld [vmem:[#allocation5 + $0x30] sm:$0xff]
    %v52 = vld [vmem:[#allocation5 + $0x38] sm:$0xff]
    %v53 = vld [vmem:[#allocation5 + $0x40] sm:$0xff]
    %v54 = vld [vmem:[#allocation5 + $0x48] sm:$0xff]
    %v55 = vld [vmem:[#allocation5 + $0x50] sm:$0xff]
    %v56 = vld [vmem:[#allocation5 + $0x58] sm:$0xff]
    %v57 = vld [vmem:[#allocation5 + $0x60] sm:$0xff]
    %v58 = vld [vmem:[#allocation5 + $0x68] sm:$0xff]
    %v59 = vld [vmem:[#allocation5 + $0x70] sm:$0xff]
    %v60 = vld [vmem:[#allocation5 + $0x78] sm:$0xff]
    %61 = vmatprep.subr.mxu0 0.0
    %62 = vmatpush1.msra.mxu0 %v45
    %63 = vmatprep.subr.mxu0 0.0
    %64 = vmatpush1.msra.mxu0 %v46
    %65 = vmatprep.subr.mxu0 0.0
    %66 = vmatpush1.msra.mxu0 %v47
    %67 = vmatprep.subr.mxu0 0.0
    %68 = vmatpush1.msra.mxu0 %v48
    %69 = vmatprep.subr.mxu0 0.0
    %70 = vmatpush1.msra.mxu0 %v49
    %71 = vmatprep.subr.mxu0 0.0
    %72 = vmatpush1.msra.mxu0 %v50
    %73 = vmatprep.subr.mxu0 0.0
    %74 = vmatpush1.msra.mxu0 %v51
    %75 = vmatprep.subr.mxu0 0.0
    %76 = vmatpush1.msra.mxu0 %v52
    %77 = vmatprep.subr.mxu0 0.0
    %78 = vmatpush1.msra.mxu0 %v53
    %79 = vmatprep.subr.mxu0 0.0
    %80 = vmatpush1.msra.mxu0 %v54
    %81 = vmatprep.subr.mxu0 0.0
    %82 = vmatpush1.msra.mxu0 %v55
    %83 = vmatprep.subr.mxu0 0.0
    %84 = vmatpush1.msra.mxu0 %v56
    %85 = vmatprep.subr.mxu0 0.0
    %86 = vmatpush1.msra.mxu0 %v57
    %87 = vmatprep.subr.mxu0 0.0
    %88 = vmatpush1.msra.mxu0 %v58
    %89 = vmatprep.subr.mxu0 0.0
    %90 = vmatpush1.msra.mxu0 %v59
    %91 = vmatprep.subr.mxu0 0.0
    %92 = vmatpush1.msra.mxu0 %v60
    %93 = vmatprep.subr.mxu0 0.0
    %94 = vmatpush1.msra.mxu0 0.0
    %95 = vmatprep.subr.mxu0 0.0
    %96 = vmatpush1.msra.mxu0 0.0
    %97 = vmatprep.subr.mxu0 0.0
    %98 = vmatpush1.msra.mxu0 0.0
    %99 = vmatprep.subr.mxu0 0.0
    %100 = vmatpush1.msra.mxu0 0.0
    %101 = vmatprep.subr.mxu0 0.0
    %102 = vmatpush1.msra.mxu0 0.0
    %103 = vmatprep.subr.mxu0 0.0
    %104 = vmatpush1.msra.mxu0 0.0
    %105 = vmatprep.subr.mxu0 0.0
    %106 = vmatpush1.msra.mxu0 0.0
    %107 = vmatprep.subr.mxu0 0.0
    %108 = vmatpush1.msra.mxu0 0.0
    %109 = vmatprep.subr.mxu0 0.0
    %110 = vmatpush1.msra.mxu0 0.0
    %111 = vmatprep.subr.mxu0 0.0
    %112 = vmatpush1.msra.mxu0 0.0
    %113 = vmatprep.subr.mxu0 0.0
    %114 = vmatpush1.msra.mxu0 0.0
    %115 = vmatprep.subr.mxu0 0.0
    %116 = vmatpush1.msra.mxu0 0.0
    %117 = vmatprep.subr.mxu0 0.0
    %118 = vmatpush1.msra.mxu0 0.0
    %119 = vmatprep.subr.mxu0 0.0
    %120 = vmatpush1.msra.mxu0 0.0
    %121 = vmatprep.subr.mxu0 0.0
    %122 = vmatpush1.msra.mxu0 0.0
    %123 = vmatprep.subr.mxu0 0.0
    %124 = vmatpush1.msra.mxu0 0.0
    %125 = vmatprep.mubr.f32.mxu0 0.0
    %126 = vmatmul.mubr.f32.gmra.mrb[0].mxu0 %v44
    %v127 = vpop.f32.mrb[0].mxu0
    %v128 = vadd.f32 0.0, %v127
    %v129 = vpop.f32.mrb[0].mxu0
    %130 = vdwg.mxu0
    %v131 = vadd.f32 %v43, %v128
    %132 = vst [vmem:[#allocation7] sm:$0xff] %v131
    // Predicated region
    $region22: #{tpu_custom_call.1} parent=1 // pred_check
      _
    $region23: #{tpu_custom_call.1} parent=1 // pred_check_branch
      %134 = sbr.rel (0) target = $region25
    $region24: #{tpu_custom_call.1} parent=1 // pred_region
      %s136 = ssub.s32 128, 128
      %137 = vsyncadd [#allocation4], %s136
      %s139 = sshll.u32 [#allocation7], 4
      %s140 = int_to_ptr.vmem [resolvable:$true] %s139
      %142 = dma.vmem_to_hbm [thread:$0]  %s140, 128, %s2, [#allocation4]
    $region25: #{tpu_custom_call.1} parent=1 // pred_fallthru
      _
    // Predicated region
    $region26: #{tpu_custom_call.1} parent=1 // pred_check
      _
    $region27: #{tpu_custom_call.1} parent=1 // pred_check_branch
      %144 = sbr.rel (0) target = $region29
    $region28: #{tpu_custom_call.1} parent=1 // pred_region
      %145 = dma.done [#allocation4], 128
    $region29: #{tpu_custom_call.1} parent=1 // pred_fallthru
      _
    %146 = vsyncpa [#allocation3], 1
    %147 = vsyncpa [#allocation6], 1
    %148 = vsyncpa [#allocation4], 1

</llo_original>
